<compile_context>
chip_gen: v6e
topology: v6e:2x2x1
jax: 0.10.0
libtpu: 0.0.40
codegen_flags: <defaults>
</compile_context>

<pallas_src>
import jax
import jax.numpy as jnp
from jax.experimental import pallas as pl
from jax.experimental.pallas import tpu as pltpu

LANE = 128  # TPU vreg lane width; feature dims are padded to a multiple of this.


def _round_up(x, m):
    return ((x + m - 1) // m) * m


def _fused_embed_gcn_kernel(
    x_ref, adj_ref,
    w1_ref, b1_ref, w2_ref, b2_ref, w3_ref, b3_ref, w6_ref, b6_ref,
    o_ref,
):
    """All four GCN layers in one kernel; activations stay on-chip."""
    adj = adj_ref[...]          # (N, N) bf16, loaded once and reused by all layers
    h = x_ref[...]              # (N, F_in_pad) bf16

    def layer(h_bf16, w_ref, b_ref, relu):
        # support = h @ W    (bf16 x bf16 -> f32 accumulate on the MXU)
        support = jnp.dot(h_bf16, w_ref[...], preferred_element_type=jnp.float32)
        # out = adj @ support (+ bias), f32 accumulate
        out = jnp.dot(adj, support.astype(jnp.bfloat16),
                      preferred_element_type=jnp.float32)
        out = out + b_ref[...]            # bias is a (1, F_pad) f32 tile
        if relu:
            out = jnp.maximum(out, 0.0)
        return out                        # f32

    h = layer(h, w1_ref, b1_ref, True).astype(jnp.bfloat16)
    h = layer(h, w2_ref, b2_ref, True).astype(jnp.bfloat16)
    h = layer(h, w3_ref, b3_ref, True).astype(jnp.bfloat16)
    out = layer(h, w6_ref, b6_ref, False)
    o_ref[...] = out.astype(o_ref.dtype)  # lane-dense (N, 128k) unmasked store


def init_gcn_params(key, in_features, out_features):
    """Deterministic init mirroring pygcn's uniform(-stdv, stdv), stdv=1/sqrt(out)."""
    stdv = 1.0 / jnp.sqrt(jnp.float32(out_features))
    kw, kb = jax.random.split(key)
    w = jax.random.uniform(kw, (in_features, out_features), jnp.float32,
                           minval=-stdv, maxval=stdv)
    b = jax.random.uniform(kb, (out_features,), jnp.float32,
                           minval=-stdv, maxval=stdv)
    return w, b


def embed_gcn_init(key, n_feat, n_hid, n_embed):
    k1, k2, k3, k6 = jax.random.split(key, 4)
    return {
        "gc1": init_gcn_params(k1, n_feat, 5 * n_hid),
        "gc2": init_gcn_params(k2, 5 * n_hid, 3 * n_hid),
        "gc3": init_gcn_params(k3, 3 * n_hid, n_hid),
        "gc6": init_gcn_params(k6, n_hid, n_embed),
    }


def pad_gcn_params(params):
    """Zero-pad weights/biases to lane-dense (multiple-of-128) widths.

    Weights are cast to bf16 (MXU inputs); biases stay f32 (added post-MXU).
    Padding with zeros is exact: padded columns stay 0 through ReLU and feed
    zero rows of the next layer's weight, so real output columns are unchanged.
    """
    padded = []
    for name in ("gc1", "gc2", "gc3", "gc6"):
        w, b = params[name]
        f_in, f_out = w.shape
        f_in_p, f_out_p = _round_up(f_in, LANE), _round_up(f_out, LANE)
        w_p = (jnp.zeros((f_in_p, f_out_p), jnp.float32)
               .at[:f_in, :f_out].set(w).astype(jnp.bfloat16))
        b_p = jnp.zeros((1, f_out_p), jnp.float32).at[0, :f_out].set(b)
        padded += [w_p, b_p]
    return tuple(padded)


def embed_gcn_forward(padded_params, x, adj, n_embed):
    """Fused 4-layer EmbedGCN forward. Returns (N, n_embed) float32."""
    n, f_in = x.shape
    f_in_p = _round_up(f_in, LANE)

    # Lane-dense, bf16 kernel inputs.
    x_p = (jnp.zeros((n, f_in_p), jnp.float32)
           .at[:, :f_in].set(x).astype(jnp.bfloat16))
    adj_b = adj.astype(jnp.bfloat16)

    w1, b1, w2, b2, w3, b3, w6, b6 = padded_params
    out_pad = w6.shape[1]

    # Advisory cost estimate for XLA's scheduler (flops on padded shapes).
    flops = 0
    bytes_accessed = x_p.size * 2 + adj_b.size * 2 + n * out_pad * 4
    fin = f_in_p
    for w, b in ((w1, b1), (w2, b2), (w3, b3), (w6, b6)):
        fout = w.shape[1]
        flops += 2 * n * fin * fout + 2 * n * n * fout
        bytes_accessed += w.size * 2 + b.size * 4
        fin = fout

    vmem = pl.BlockSpec(memory_space=pltpu.MemorySpace.VMEM)
    out_p = pl.pallas_call(
        _fused_embed_gcn_kernel,
        out_shape=jax.ShapeDtypeStruct((n, out_pad), jnp.float32),
        in_specs=[vmem] * 10,
        out_specs=vmem,
        cost_estimate=pl.CostEstimate(flops=flops, transcendentals=0,
                                      bytes_accessed=bytes_accessed),
    )(x_p, adj_b, w1, b1, w2, b2, w3, b3, w6, b6)

    # Slice off the zero-padded columns outside the kernel.
    return out_p[:, :n_embed]


def _reference_forward(params, x, adj):
    """Pure-JAX reference with the SAME bf16-input / f32-accumulate semantics."""
    adj_b = adj.astype(jnp.bfloat16)

    def layer(h_f32, w, b, relu):
        s = jnp.dot(h_f32.astype(jnp.bfloat16), w.astype(jnp.bfloat16),
                    preferred_element_type=jnp.float32)
        out = jnp.dot(adj_b, s.astype(jnp.bfloat16),
                      preferred_element_type=jnp.float32) + b
        return jnp.maximum(out, 0.0) if relu else out

    w1, b1 = params["gc1"]
    w2, b2 = params["gc2"]
    w3, b3 = params["gc3"]
    w6, b6 = params["gc6"]
    h = layer(x, w1, b1, True)
    h = layer(h, w2, b2, True)
    h = layer(h, w3, b3, True)
    return layer(h, w6, b6, False)


if __name__ == "__main__":
    # Small, module-consistent shapes: N graph nodes with n_feat input features.
    N = 16        # number of graph nodes
    n_feat = 16   # input feature dim
    n_hid = 8     # hidden dim -> layer widths 40 / 24 / 8
    n_embed = 8   # output embedding dim

    key = jax.random.PRNGKey(0)
    kx, kadj, kparams = jax.random.split(key, 3)

    x = jax.random.normal(kx, (N, n_feat), jnp.float32)
    # Symmetric, row-normalized dense adjacency (deterministic).
    a = jax.random.uniform(kadj, (N, N), jnp.float32)
    a = (a + a.T) * 0.5 + jnp.eye(N, dtype=jnp.float32)
    adj = a / jnp.sum(a, axis=1, keepdims=True)

    params = embed_gcn_init(kparams, n_feat, n_hid, n_embed)
    padded_params = pad_gcn_params(params)

    out = embed_gcn_forward(padded_params, x, adj, n_embed)
    out = jax.block_until_ready(out)

    ref = _reference_forward(params, x, adj)
    assert out.shape == (N, n_embed), out.shape
    assert jnp.allclose(out, ref, atol=1e-3, rtol=1e-3), "mismatch vs reference"

    print("KERNEL_OK")
</pallas_src>

<mosaic_0001>
module attributes {stable_mosaic.version = 11 : i64} {
  func.func @_fused_embed_gcn_kernel(%arg0: memref<16x128xbf16, #tpu.memory_space<vmem>>, %arg1: memref<16x16xbf16, #tpu.memory_space<vmem>>, %arg2: memref<128x128xbf16, #tpu.memory_space<vmem>>, %arg3: memref<1x128xf32, #tpu.memory_space<vmem>>, %arg4: memref<128x128xbf16, #tpu.memory_space<vmem>>, %arg5: memref<1x128xf32, #tpu.memory_space<vmem>>, %arg6: memref<128x128xbf16, #tpu.memory_space<vmem>>, %arg7: memref<1x128xf32, #tpu.memory_space<vmem>>, %arg8: memref<128x128xbf16, #tpu.memory_space<vmem>>, %arg9: memref<1x128xf32, #tpu.memory_space<vmem>>, %arg10: memref<16x128xf32, #tpu.memory_space<vmem>>) attributes {dimension_semantics = [], scalar_prefetch = 0 : i64, scratch_operands = 0 : i64, tpu.core_type = #tpu.core_type<tc>} {
    %c0 = arith.constant 0 : index
    %c0_0 = arith.constant 0 : index
    %0 = vector.load %arg1[%c0, %c0_0] : memref<16x16xbf16, #tpu.memory_space<vmem>>, vector<16x16xbf16>
    %c0_1 = arith.constant 0 : index
    %c0_2 = arith.constant 0 : index
    %1 = vector.load %arg0[%c0_1, %c0_2] : memref<16x128xbf16, #tpu.memory_space<vmem>>, vector<16x128xbf16>
    %c0_3 = arith.constant 0 : index
    %c0_4 = arith.constant 0 : index
    %2 = vector.load %arg2[%c0_3, %c0_4] : memref<128x128xbf16, #tpu.memory_space<vmem>>, vector<128x128xbf16>
    %cst = arith.constant dense<0.000000e+00> : vector<16x128xf32>
    %3 = tpu.matmul %1, %2, %cst {dimension_numbers = #tpu.dot_dimension_numbers<[1], [0], [0], [1], [0, 0, 1, 1], [], []>} : vector<16x128xbf16>, vector<128x128xbf16>, vector<16x128xf32> -> vector<16x128xf32>
    %4 = arith.truncf %3 : vector<16x128xf32> to vector<16x128xbf16>
    %cst_5 = arith.constant dense<0.000000e+00> : vector<16x128xf32>
    %5 = tpu.matmul %0, %4, %cst_5 {dimension_numbers = #tpu.dot_dimension_numbers<[1], [0], [0], [1], [0, 0, 1, 1], [], []>} : vector<16x16xbf16>, vector<16x128xbf16>, vector<16x128xf32> -> vector<16x128xf32>
    %c0_6 = arith.constant 0 : index
    %c0_7 = arith.constant 0 : index
    %6 = vector.load %arg3[%c0_6, %c0_7] : memref<1x128xf32, #tpu.memory_space<vmem>>, vector<1x128xf32>
    %7 = vector.broadcast %6 : vector<1x128xf32> to vector<16x128xf32>
    %8 = arith.addf %5, %7 : vector<16x128xf32>
    %cst_8 = arith.constant 0.000000e+00 : f32
    %9 = vector.broadcast %cst_8 : f32 to vector<16x128xf32>
    %10 = arith.maximumf %8, %9 : vector<16x128xf32>
    %11 = arith.truncf %10 : vector<16x128xf32> to vector<16x128xbf16>
    %c0_9 = arith.constant 0 : index
    %c0_10 = arith.constant 0 : index
    %12 = vector.load %arg4[%c0_9, %c0_10] : memref<128x128xbf16, #tpu.memory_space<vmem>>, vector<128x128xbf16>
    %cst_11 = arith.constant dense<0.000000e+00> : vector<16x128xf32>
    %13 = tpu.matmul %11, %12, %cst_11 {dimension_numbers = #tpu.dot_dimension_numbers<[1], [0], [0], [1], [0, 0, 1, 1], [], []>} : vector<16x128xbf16>, vector<128x128xbf16>, vector<16x128xf32> -> vector<16x128xf32>
    %14 = arith.truncf %13 : vector<16x128xf32> to vector<16x128xbf16>
    %cst_12 = arith.constant dense<0.000000e+00> : vector<16x128xf32>
    %15 = tpu.matmul %0, %14, %cst_12 {dimension_numbers = #tpu.dot_dimension_numbers<[1], [0], [0], [1], [0, 0, 1, 1], [], []>} : vector<16x16xbf16>, vector<16x128xbf16>, vector<16x128xf32> -> vector<16x128xf32>
    %c0_13 = arith.constant 0 : index
    %c0_14 = arith.constant 0 : index
    %16 = vector.load %arg5[%c0_13, %c0_14] : memref<1x128xf32, #tpu.memory_space<vmem>>, vector<1x128xf32>
    %17 = vector.broadcast %16 : vector<1x128xf32> to vector<16x128xf32>
    %18 = arith.addf %15, %17 : vector<16x128xf32>
    %cst_15 = arith.constant 0.000000e+00 : f32
    %19 = vector.broadcast %cst_15 : f32 to vector<16x128xf32>
    %20 = arith.maximumf %18, %19 : vector<16x128xf32>
    %21 = arith.truncf %20 : vector<16x128xf32> to vector<16x128xbf16>
    %c0_16 = arith.constant 0 : index
    %c0_17 = arith.constant 0 : index
    %22 = vector.load %arg6[%c0_16, %c0_17] : memref<128x128xbf16, #tpu.memory_space<vmem>>, vector<128x128xbf16>
    %cst_18 = arith.constant dense<0.000000e+00> : vector<16x128xf32>
    %23 = tpu.matmul %21, %22, %cst_18 {dimension_numbers = #tpu.dot_dimension_numbers<[1], [0], [0], [1], [0, 0, 1, 1], [], []>} : vector<16x128xbf16>, vector<128x128xbf16>, vector<16x128xf32> -> vector<16x128xf32>
    %24 = arith.truncf %23 : vector<16x128xf32> to vector<16x128xbf16>
    %cst_19 = arith.constant dense<0.000000e+00> : vector<16x128xf32>
    %25 = tpu.matmul %0, %24, %cst_19 {dimension_numbers = #tpu.dot_dimension_numbers<[1], [0], [0], [1], [0, 0, 1, 1], [], []>} : vector<16x16xbf16>, vector<16x128xbf16>, vector<16x128xf32> -> vector<16x128xf32>
    %c0_20 = arith.constant 0 : index
    %c0_21 = arith.constant 0 : index
    %26 = vector.load %arg7[%c0_20, %c0_21] : memref<1x128xf32, #tpu.memory_space<vmem>>, vector<1x128xf32>
    %27 = vector.broadcast %26 : vector<1x128xf32> to vector<16x128xf32>
    %28 = arith.addf %25, %27 : vector<16x128xf32>
    %cst_22 = arith.constant 0.000000e+00 : f32
    %29 = vector.broadcast %cst_22 : f32 to vector<16x128xf32>
    %30 = arith.maximumf %28, %29 : vector<16x128xf32>
    %31 = arith.truncf %30 : vector<16x128xf32> to vector<16x128xbf16>
    %c0_23 = arith.constant 0 : index
    %c0_24 = arith.constant 0 : index
    %32 = vector.load %arg8[%c0_23, %c0_24] : memref<128x128xbf16, #tpu.memory_space<vmem>>, vector<128x128xbf16>
    %cst_25 = arith.constant dense<0.000000e+00> : vector<16x128xf32>
    %33 = tpu.matmul %31, %32, %cst_25 {dimension_numbers = #tpu.dot_dimension_numbers<[1], [0], [0], [1], [0, 0, 1, 1], [], []>} : vector<16x128xbf16>, vector<128x128xbf16>, vector<16x128xf32> -> vector<16x128xf32>
    %34 = arith.truncf %33 : vector<16x128xf32> to vector<16x128xbf16>
    %cst_26 = arith.constant dense<0.000000e+00> : vector<16x128xf32>
    %35 = tpu.matmul %0, %34, %cst_26 {dimension_numbers = #tpu.dot_dimension_numbers<[1], [0], [0], [1], [0, 0, 1, 1], [], []>} : vector<16x16xbf16>, vector<16x128xbf16>, vector<16x128xf32> -> vector<16x128xf32>
    %c0_27 = arith.constant 0 : index
    %c0_28 = arith.constant 0 : index
    %36 = vector.load %arg9[%c0_27, %c0_28] : memref<1x128xf32, #tpu.memory_space<vmem>>, vector<1x128xf32>
    %37 = vector.broadcast %36 : vector<1x128xf32> to vector<16x128xf32>
    %38 = arith.addf %35, %37 : vector<16x128xf32>
    %c0_29 = arith.constant 0 : index
    %c0_30 = arith.constant 0 : index
    %39 = vector.load %arg10[%c0_29, %c0_30] : memref<16x128xf32, #tpu.memory_space<vmem>>, vector<16x128xf32>
    tpu.vector_store %arg10[%c0_29, %c0_30], %38 {strides = array<i32>} : memref<16x128xf32, #tpu.memory_space<vmem>>, vector<16x128xf32>,
    return
  }
}

</mosaic_0001>

<llo_original>
// kernel: tpu_custom_call.1
$region0: #{tpu_custom_call.1}
  #allocation0 [shape = 'u32[]', space=smem, size = 0x4, offset = 0x4, fixed_abs, tag = 'smem constant byte address 0x4 - core index']
  #allocation1 [shape = 'u32[144,128]{1,0:T(1,128)}', space=vmem, size = 0x12000, scoped, tag = 'internal scratch']
  %s0 = inlined_call_operand.hbm [shape: bf16[16,128], index: 0, kind: input, shape index: {}]
  %s1 = inlined_call_operand.hbm [shape: bf16[16,16], index: 1, kind: input, shape index: {}]
  %s2 = inlined_call_operand.hbm [shape: bf16[128,128], index: 2, kind: input, shape index: {}]
  %s3 = inlined_call_operand.vmem [shape: f32[1,128], index: 3, kind: input, shape index: {}]
  %s4 = inlined_call_operand.hbm [shape: bf16[128,128], index: 4, kind: input, shape index: {}]
  %s5 = inlined_call_operand.vmem [shape: f32[1,128], index: 5, kind: input, shape index: {}]
  %s6 = inlined_call_operand.hbm [shape: bf16[128,128], index: 6, kind: input, shape index: {}]
  %s7 = inlined_call_operand.vmem [shape: f32[1,128], index: 7, kind: input, shape index: {}]
  %s8 = inlined_call_operand.hbm [shape: bf16[128,128], index: 8, kind: input, shape index: {}]
  %s9 = inlined_call_operand.vmem [shape: f32[1,128], index: 9, kind: input, shape index: {}]
  %s10 = inlined_call_operand.hbm [shape: f32[16,128], index: 10, kind: output, shape index: {}]
  %s11 = sld [smem:[#allocation0]]
  $region74: #{tpu_custom_call.1} parent=0
    _
  %s13 = ssub.s32 1, %s11
  %s14 = scalar_select 0, %s13, %s11
  $region1: #{tpu_custom_call.1} parent=0
    #allocation2 [shape = 'u8[4096]{0}', space=vmem, size = 0x1000, scoped, tag = 'input window, operand 0, single buffered']
    #allocation3 [shape = 's32[1]{0}', space=sflag, size = 0x4, scoped, tag = 'scoped memory for tpu_custom_call.1']
    #allocation4 [shape = 's32[1]{0}', space=sflag, size = 0x4, scoped, tag = 'scoped memory for tpu_custom_call.1']
    #allocation5 [shape = 'u8[4096]{0}', space=vmem, size = 0x1000, scoped, tag = 'input window, operand 1, single buffered']
    #allocation6 [shape = 's32[1]{0}', space=sflag, size = 0x4, scoped, tag = 'scoped memory for tpu_custom_call.1']
    #allocation7 [shape = 'u8[32768]{0}', space=vmem, size = 0x8000, scoped, tag = 'input window, operand 2, single buffered']
    #allocation8 [shape = 'u8[32768]{0}', space=vmem, size = 0x8000, scoped, tag = 'input window, operand 4, single buffered']
    #allocation9 [shape = 's32[1]{0}', space=sflag, size = 0x4, scoped, tag = 'scoped memory for tpu_custom_call.1']
    #allocation10 [shape = 'u8[32768]{0}', space=vmem, size = 0x8000, scoped, tag = 'input window, operand 6, single buffered']
    #allocation11 [shape = 'u8[32768]{0}', space=vmem, size = 0x8000, scoped, tag = 'input window, operand 8, single buffered']
    #allocation12 [shape = 's32[1]{0}', space=sflag, size = 0x4, scoped, tag = 'scoped memory for tpu_custom_call.1']
    #allocation13 [shape = 'u8[8192]{0}', space=vmem, size = 0x2000, scoped, tag = 'output window, operand 0, single buffered']
    %15 = vsyncpa [#allocation3], 0
    %16 = vsyncpa [#allocation6], 0
    %17 = vsyncpa [#allocation9], 0
    %18 = vsyncpa [#allocation12], 0
    %19 = vsyncpa [#allocation4], 0
    // Predicated region
    $region2: #{tpu_custom_call.1} parent=1 // pred_check
      _
    $region3: #{tpu_custom_call.1} parent=1 // pred_check_branch
      %21 = sbr.rel (0) target = $region5
    $region4: #{tpu_custom_call.1} parent=1 // pred_region
      %s23 = ssub.s32 128, 128
      %24 = vsyncadd [#allocation3], %s23
      %s25 = sshll.u32 [#allocation2], 4
      %s26 = int_to_ptr.vmem [resolvable:$true] %s25
      %31 = dma.hbm_to_vmem [thread:$0]  %s0, 128, %s26, [#allocation3], 64, 64, 4
    $region5: #{tpu_custom_call.1} parent=1 // pred_fallthru
      _
    // Predicated region
    $region6: #{tpu_custom_call.1} parent=1 // pred_check
      _
    $region7: #{tpu_custom_call.1} parent=1 // pred_check_branch
      %33 = sbr.rel (0) target = $region9
    $region8: #{tpu_custom_call.1} parent=1 // pred_region
      %s35 = ssub.s32 128, 128
      %36 = vsyncadd [#allocation6], %s35
      %s37 = sshll.u32 [#allocation5], 4
      %s38 = int_to_ptr.vmem [resolvable:$true] %s37
      %43 = dma.hbm_to_vmem [thread:$0]  %s1, 128, %s38, [#allocation6], 64, 64, 4
    $region9: #{tpu_custom_call.1} parent=1 // pred_fallthru
      _
    // Predicated region
    $region10: #{tpu_custom_call.1} parent=1 // pred_check
      _
    $region11: #{tpu_custom_call.1} parent=1 // pred_check_branch
      %45 = sbr.rel (0) target = $region13
    $region12: #{tpu_custom_call.1} parent=1 // pred_region
      %s47 = ssub.s32 1024, 1024
      %48 = vsyncadd [#allocation6], %s47
      %s49 = sshll.u32 [#allocation7], 4
      %s50 = int_to_ptr.vmem [resolvable:$true] %s49
      %55 = dma.hbm_to_vmem [thread:$0]  %s2, 1024, %s50, [#allocation6], 64, 64, 4
    $region13: #{tpu_custom_call.1} parent=1 // pred_fallthru
      _
    // Predicated region
    $region14: #{tpu_custom_call.1} parent=1 // pred_check
      _
    $region15: #{tpu_custom_call.1} parent=1 // pred_check_branch
      %57 = sbr.rel (0) target = $region17
    $region16: #{tpu_custom_call.1} parent=1 // pred_region
      _
    $region17: #{tpu_custom_call.1} parent=1 // pred_fallthru
      _
    // Predicated region
    $region18: #{tpu_custom_call.1} parent=1 // pred_check
      _
    $region19: #{tpu_custom_call.1} parent=1 // pred_check_branch
      %59 = sbr.rel (0) target = $region21
    $region20: #{tpu_custom_call.1} parent=1 // pred_region
      %s61 = ssub.s32 1024, 1024
      %62 = vsyncadd [#allocation9], %s61
      %s63 = sshll.u32 [#allocation8], 4
      %s64 = int_to_ptr.vmem [resolvable:$true] %s63
      %69 = dma.hbm_to_vmem [thread:$0]  %s4, 1024, %s64, [#allocation9], 64, 64, 4
    $region21: #{tpu_custom_call.1} parent=1 // pred_fallthru
      _
    // Predicated region
    $region22: #{tpu_custom_call.1} parent=1 // pred_check
      _
    $region23: #{tpu_custom_call.1} parent=1 // pred_check_branch
      %71 = sbr.rel (0) target = $region25
    $region24: #{tpu_custom_call.1} parent=1 // pred_region
      _
    $region25: #{tpu_custom_call.1} parent=1 // pred_fallthru
      _
    // Predicated region
    $region26: #{tpu_custom_call.1} parent=1 // pred_check
      _
    $region27: #{tpu_custom_call.1} parent=1 // pred_check_branch
      %73 = sbr.rel (0) target = $region29
    $region28: #{tpu_custom_call.1} parent=1 // pred_region
      %s75 = ssub.s32 1024, 1024
      %76 = vsyncadd [#allocation9], %s75
      %s77 = sshll.u32 [#allocation10], 4
      %s78 = int_to_ptr.vmem [resolvable:$true] %s77
      %83 = dma.hbm_to_vmem [thread:$0]  %s6, 1024, %s78, [#allocation9], 64, 64, 4
    $region29: #{tpu_custom_call.1} parent=1 // pred_fallthru
      _
    // Predicated region
    $region30: #{tpu_custom_call.1} parent=1 // pred_check
      _
    $region31: #{tpu_custom_call.1} parent=1 // pred_check_branch
      %85 = sbr.rel (0) target = $region33
    $region32: #{tpu_custom_call.1} parent=1 // pred_region
      _
    $region33: #{tpu_custom_call.1} parent=1 // pred_fallthru
      _
    // Predicated region
    $region34: #{tpu_custom_call.1} parent=1 // pred_check
      _
    $region35: #{tpu_custom_call.1} parent=1 // pred_check_branch
      %87 = sbr.rel (0) target = $region37
    $region36: #{tpu_custom_call.1} parent=1 // pred_region
      %s89 = ssub.s32 1024, 1024
      %90 = vsyncadd [#allocation12], %s89
      %s91 = sshll.u32 [#allocation11], 4
      %s92 = int_to_ptr.vmem [resolvable:$true] %s91
      %97 = dma.hbm_to_vmem [thread:$0]  %s8, 1024, %s92, [#allocation12], 64, 64, 4
    $region37: #{tpu_custom_call.1} parent=1 // pred_fallthru
      _
    // Predicated region
    $region38: #{tpu_custom_call.1} parent=1 // pred_check
      _
    $region39: #{tpu_custom_call.1} parent=1 // pred_check_branch
      %99 = sbr.rel (0) target = $region41
    $region40: #{tpu_custom_call.1} parent=1 // pred_region
      _
    $region41: #{tpu_custom_call.1} parent=1 // pred_fallthru
      _
    // Predicated region
    $region42: #{tpu_custom_call.1} parent=1 // pred_check
      _
    $region43: #{tpu_custom_call.1} parent=1 // pred_check_branch
      %101 = sbr.rel (0) target = $region45
    $region44: #{tpu_custom_call.1} parent=1 // pred_region
      %102 = dma.done [#allocation3], 128
    $region45: #{tpu_custom_call.1} parent=1 // pred_fallthru
      _
    // Predicated region
    $region46: #{tpu_custom_call.1} parent=1 // pred_check
      _
    $region47: #{tpu_custom_call.1} parent=1 // pred_check_branch
      %104 = sbr.rel (0) target = $region49
    $region48: #{tpu_custom_call.1} parent=1 // pred_region
      %105 = dma.done [#allocation6], 128
    $region49: #{tpu_custom_call.1} parent=1 // pred_fallthru
      _
    // Predicated region
    $region50: #{tpu_custom_call.1} parent=1 // pred_check
      _
    $region51: #{tpu_custom_call.1} parent=1 // pred_check_branch
      %107 = sbr.rel (0) target = $region53
    $region52: #{tpu_custom_call.1} parent=1 // pred_region
      %108 = dma.done [#allocation6], 1024
    $region53: #{tpu_custom_call.1} parent=1 // pred_fallthru
      _
    // Predicated region
    $region54: #{tpu_custom_call.1} parent=1 // pred_check
      _
    $region55: #{tpu_custom_call.1} parent=1 // pred_check_branch
      %110 = sbr.rel (0) target = $region57
    $region56: #{tpu_custom_call.1} parent=1 // pred_region
      %111 = dma.done [#allocation9], 1024
    $region57: #{tpu_custom_call.1} parent=1 // pred_fallthru
      _
    // Predicated region
    $region58: #{tpu_custom_call.1} parent=1 // pred_check
      _
    $region59: #{tpu_custom_call.1} parent=1 // pred_check_branch
      %113 = sbr.rel (0) target = $region61
    $region60: #{tpu_custom_call.1} parent=1 // pred_region
      %114 = dma.done [#allocation9], 1024
    $region61: #{tpu_custom_call.1} parent=1 // pred_fallthru
      _
    // Predicated region
    $region62: #{tpu_custom_call.1} parent=1 // pred_check
      _
    $region63: #{tpu_custom_call.1} parent=1 // pred_check_branch
      %116 = sbr.rel (0) target = $region65
    $region64: #{tpu_custom_call.1} parent=1 // pred_region
      %117 = dma.done [#allocation12], 1024
    $region65: #{tpu_custom_call.1} parent=1 // pred_fallthru
      _
    %v119 = vld [vmem:[#allocation5] sm:$0xf]
    %v120 = vld [vmem:[#allocation5 + $0x4] sm:$0xf]
    %v121 = vld [vmem:[#allocation2] sm:$0xf]
    %v122 = vld [vmem:[#allocation2 + $0x4] sm:$0xf]
    %v123 = vld [vmem:[#allocation7] sm:$0xf]
    %v124 = vld [vmem:[#allocation7 + $0x4] sm:$0xf]
    %v125 = vld [vmem:[#allocation7 + $0x8] sm:$0xf]
    %v126 = vld [vmem:[#allocation7 + $0xc] sm:$0xf]
    %v127 = vld [vmem:[#allocation7 + $0x10] sm:$0xf]
    %v128 = vld [vmem:[#allocation7 + $0x14] sm:$0xf]
    %v129 = vld [vmem:[#allocation7 + $0x18] sm:$0xf]
    %v130 = vld [vmem:[#allocation7 + $0x1c] sm:$0xf]
    %v131 = vld [vmem:[#allocation7 + $0x20] sm:$0xf]
    %v132 = vld [vmem:[#allocation7 + $0x24] sm:$0xf]
    %v133 = vld [vmem:[#allocation7 + $0x28] sm:$0xf]
    %v134 = vld [vmem:[#allocation7 + $0x2c] sm:$0xf]
    %v135 = vld [vmem:[#allocation7 + $0x30] sm:$0xf]
    %v136 = vld [vmem:[#allocation7 + $0x34] sm:$0xf]
    %v137 = vld [vmem:[#allocation7 + $0x38] sm:$0xf]
    %v138 = vld [vmem:[#allocation7 + $0x3c] sm:$0xf]
    %v141 = vunpack.c.l.b16 %v121
    %v142 = vunpack.c.l.b16 %v122
    %v143 = vpack.c.b16 %v142, %v141
    %v161 = vunpack.c.l.b16 %v123
    %v162 = vunpack.c.l.b16 %v124
    %v163 = vunpack.c.l.b16 %v125
    %v164 = vunpack.c.l.b16 %v126
    %v165 = vunpack.c.l.b16 %v127
    %v166 = vunpack.c.l.b16 %v128
    %v167 = vunpack.c.l.b16 %v129
    %v168 = vunpack.c.l.b16 %v130
    %v169 = vunpack.c.l.b16 %v131
    %v170 = vunpack.c.l.b16 %v132
    %v171 = vunpack.c.l.b16 %v133
    %v172 = vunpack.c.l.b16 %v134
    %v173 = vunpack.c.l.b16 %v135
    %v174 = vunpack.c.l.b16 %v136
    %v175 = vunpack.c.l.b16 %v137
    %v176 = vunpack.c.l.b16 %v138
    %v177 = vpack.c.b16 %v162, %v161
    %v178 = vpack.c.b16 %v164, %v163
    %v179 = vpack.c.b16 %v166, %v165
    %v180 = vpack.c.b16 %v168, %v167
    %v181 = vpack.c.b16 %v170, %v169
    %v182 = vpack.c.b16 %v172, %v171
    %v183 = vpack.c.b16 %v174, %v173
    %v184 = vpack.c.b16 %v176, %v175
    %193 = vmatprep.subr.bf16.mxu0 0
    %194 = vmatpush1.bf16.msra.mxu0 %v184
    %195 = vmatprep.subr.bf16.mxu0 0
    %196 = vmatpush1.bf16.msra.mxu0 %v183
    %197 = vmatprep.subr.bf16.mxu0 0
    %198 = vmatpush1.bf16.msra.mxu0 %v182
    %199 = vmatprep.subr.bf16.mxu0 0
    %200 = vmatpush1.bf16.msra.mxu0 %v181
    %201 = vmatprep.subr.bf16.mxu0 0
    %202 = vmatpush1.bf16.msra.mxu0 %v180
    %203 = vmatprep.subr.bf16.mxu0 0
    %204 = vmatpush1.bf16.msra.mxu0 %v179
    %205 = vmatprep.subr.bf16.mxu0 0
    %206 = vmatpush1.bf16.msra.mxu0 %v178
    %207 = vmatprep.subr.bf16.mxu0 0
    %208 = vmatpush1.bf16.msra.mxu0 %v177
    %209 = vmatprep.subr.bf16.mxu0 0
    %210 = vmatpush2.bf16.msra.mxu0 0
    %211 = vmatprep.subr.bf16.mxu0 0
    %212 = vmatpush2.bf16.msra.mxu0 0
    %213 = vmatprep.subr.bf16.mxu0 0
    %214 = vmatpush2.bf16.msra.mxu0 0
    %215 = vmatprep.subr.bf16.mxu0 0
    %216 = vmatpush2.bf16.msra.mxu0 0
    %217 = vmatprep.subr.bf16.mxu0 0
    %218 = vmatpush2.bf16.msra.mxu0 0
    %219 = vmatprep.subr.bf16.mxu0 0
    %220 = vmatpush2.bf16.msra.mxu0 0
    %221 = vmatprep.subr.bf16.mxu0 0
    %222 = vmatpush2.bf16.msra.mxu0 0
    %223 = vmatprep.subr.bf16.mxu0 0
    %224 = vmatpush2.bf16.msra.mxu0 0
    %225 = vmatprep.mubr.bf16.mxu0 0
    %226 = vmatmul.mubr.bf16.gmra.mxu0 %v143
    %v227 = vpop.f32.mrf.mxu0
    %v228 = vadd.f32 0.0, %v227
    %v229 = vpop.f32.mrf.mxu0
    %v230 = vpop.f32.mrf.mxu0
    %v231 = vadd.f32 0.0, %v230
    %v232 = vpop.f32.mrf.mxu0
    %233 = vdwg.mxu0
    %v234 = vpack.c.bf16 %v231, %v228
    %v235 = vld [vmem:[%s3] sm:$0x1]
    %v237 = vlaneseq
    %v238 = vshrl.u32 %v237, 7
    %v239 = vsub.s32 0, %v238
    %v240 = vrot.slane %v235, %v239
    %v244 = vunpack.c.l.b16 %v119
    %v245 = vunpack.c.l.b16 %v120
    %v246 = vpack.c.b16 %v245, %v244
    %vm247 = vcmask 130048
    %v249 = vsel %vm247, %v246, 0
    %251 = vmatprep.subr.bf16.mxu0 0
    %252 = vmatpush1.bf16.msra.mxu0 0
    %253 = vmatprep.subr.bf16.mxu0 0
    %254 = vmatpush1.bf16.msra.mxu0 0
    %255 = vmatprep.subr.bf16.mxu0 0
    %256 = vmatpush1.bf16.msra.mxu0 0
    %257 = vmatprep.subr.bf16.mxu0 0
    %258 = vmatpush1.bf16.msra.mxu0 0
    %259 = vmatprep.subr.bf16.mxu0 0
    %260 = vmatpush1.bf16.msra.mxu0 0
    %261 = vmatprep.subr.bf16.mxu0 0
    %262 = vmatpush1.bf16.msra.mxu0 0
    %263 = vmatprep.subr.bf16.mxu0 0
    %264 = vmatpush1.bf16.msra.mxu0 0
    %265 = vmatprep.subr.bf16.mxu0 0
    %266 = vmatpush1.bf16.msra.mxu0 %v234
    %267 = vmatprep.subr.bf16.mxu0 0
    %268 = vmatpush2.bf16.msra.mxu0 0
    %269 = vmatprep.subr.bf16.mxu0 0
    %270 = vmatpush2.bf16.msra.mxu0 0
    %271 = vmatprep.subr.bf16.mxu0 0
    %272 = vmatpush2.bf16.msra.mxu0 0
    %273 = vmatprep.subr.bf16.mxu0 0
    %274 = vmatpush2.bf16.msra.mxu0 0
    %275 = vmatprep.subr.bf16.mxu0 0
    %276 = vmatpush2.bf16.msra.mxu0 0
    %277 = vmatprep.subr.bf16.mxu0 0
    %278 = vmatpush2.bf16.msra.mxu0 0
    %279 = vmatprep.subr.bf16.mxu0 0
    %280 = vmatpush2.bf16.msra.mxu0 0
    %281 = vmatprep.subr.bf16.mxu0 0
    %282 = vmatpush2.bf16.msra.mxu0 0
    %283 = vmatprep.mubr.bf16.mxu0 0
    %284 = vmatmul.mubr.bf16.gmra.mxu0 %v249
    %v285 = vpop.f32.mrf.mxu0
    %v286 = vadd.f32 %v240, %v285
    %v287 = vpop.f32.mrf.mxu0
    %v288 = vpop.f32.mrf.mxu0
    %v289 = vadd.f32 %v240, %v288
    %v290 = vpop.f32.mrf.mxu0
    %291 = vdwg.mxu0
    %v292 = vmax.f32 %v286, 0.0
    %v293 = vmax.f32 %v289, 0.0
    %v294 = vpack.c.bf16 %v293, %v292
    %v295 = vld [vmem:[#allocation8] sm:$0xf]
    %v296 = vld [vmem:[#allocation8 + $0x4] sm:$0xf]
    %v297 = vld [vmem:[#allocation8 + $0x8] sm:$0xf]
    %v298 = vld [vmem:[#allocation8 + $0xc] sm:$0xf]
    %v299 = vld [vmem:[#allocation8 + $0x10] sm:$0xf]
    %v300 = vld [vmem:[#allocation8 + $0x14] sm:$0xf]
    %v301 = vld [vmem:[#allocation8 + $0x18] sm:$0xf]
    %v302 = vld [vmem:[#allocation8 + $0x1c] sm:$0xf]
    %v303 = vld [vmem:[#allocation8 + $0x20] sm:$0xf]
    %v304 = vld [vmem:[#allocation8 + $0x24] sm:$0xf]
    %v305 = vld [vmem:[#allocation8 + $0x28] sm:$0xf]
    %v306 = vld [vmem:[#allocation8 + $0x2c] sm:$0xf]
    %v307 = vld [vmem:[#allocation8 + $0x30] sm:$0xf]
    %v308 = vld [vmem:[#allocation8 + $0x34] sm:$0xf]
    %v309 = vld [vmem:[#allocation8 + $0x38] sm:$0xf]
    %v310 = vld [vmem:[#allocation8 + $0x3c] sm:$0xf]
    %v327 = vunpack.c.l.b16 %v295
    %v328 = vunpack.c.l.b16 %v296
    %v329 = vunpack.c.l.b16 %v297
    %v330 = vunpack.c.l.b16 %v298
    %v331 = vunpack.c.l.b16 %v299
    %v332 = vunpack.c.l.b16 %v300
    %v333 = vunpack.c.l.b16 %v301
    %v334 = vunpack.c.l.b16 %v302
    %v335 = vunpack.c.l.b16 %v303
    %v336 = vunpack.c.l.b16 %v304
    %v337 = vunpack.c.l.b16 %v305
    %v338 = vunpack.c.l.b16 %v306
    %v339 = vunpack.c.l.b16 %v307
    %v340 = vunpack.c.l.b16 %v308
    %v341 = vunpack.c.l.b16 %v309
    %v342 = vunpack.c.l.b16 %v310
    %v343 = vpack.c.b16 %v328, %v327
    %v344 = vpack.c.b16 %v330, %v329
    %v345 = vpack.c.b16 %v332, %v331
    %v346 = vpack.c.b16 %v334, %v333
    %v347 = vpack.c.b16 %v336, %v335
    %v348 = vpack.c.b16 %v338, %v337
    %v349 = vpack.c.b16 %v340, %v339
    %v350 = vpack.c.b16 %v342, %v341
    %359 = vmatprep.subr.bf16.mxu0 0
    %360 = vmatpush1.bf16.msra.mxu0 %v350
    %361 = vmatprep.subr.bf16.mxu0 0
    %362 = vmatpush1.bf16.msra.mxu0 %v349
    %363 = vmatprep.subr.bf16.mxu0 0
    %364 = vmatpush1.bf16.msra.mxu0 %v348
    %365 = vmatprep.subr.bf16.mxu0 0
    %366 = vmatpush1.bf16.msra.mxu0 %v347
    %367 = vmatprep.subr.bf16.mxu0 0
    %368 = vmatpush1.bf16.msra.mxu0 %v346
    %369 = vmatprep.subr.bf16.mxu0 0
    %370 = vmatpush1.bf16.msra.mxu0 %v345
    %371 = vmatprep.subr.bf16.mxu0 0
    %372 = vmatpush1.bf16.msra.mxu0 %v344
    %373 = vmatprep.subr.bf16.mxu0 0
    %374 = vmatpush1.bf16.msra.mxu0 %v343
    %375 = vmatprep.subr.bf16.mxu0 0
    %376 = vmatpush2.bf16.msra.mxu0 0
    %377 = vmatprep.subr.bf16.mxu0 0
    %378 = vmatpush2.bf16.msra.mxu0 0
    %379 = vmatprep.subr.bf16.mxu0 0
    %380 = vmatpush2.bf16.msra.mxu0 0
    %381 = vmatprep.subr.bf16.mxu0 0
    %382 = vmatpush2.bf16.msra.mxu0 0
    %383 = vmatprep.subr.bf16.mxu0 0
    %384 = vmatpush2.bf16.msra.mxu0 0
    %385 = vmatprep.subr.bf16.mxu0 0
    %386 = vmatpush2.bf16.msra.mxu0 0
    %387 = vmatprep.subr.bf16.mxu0 0
    %388 = vmatpush2.bf16.msra.mxu0 0
    %389 = vmatprep.subr.bf16.mxu0 0
    %390 = vmatpush2.bf16.msra.mxu0 0
    %391 = vmatprep.mubr.bf16.mxu0 0
    %392 = vmatmul.mubr.bf16.gmra.mxu0 %v294
    %v393 = vpop.f32.mrf.mxu0
    %v394 = vadd.f32 0.0, %v393
    %v395 = vpop.f32.mrf.mxu0
    %v396 = vpop.f32.mrf.mxu0
    %v397 = vadd.f32 0.0, %v396
    %v398 = vpop.f32.mrf.mxu0
    %399 = vdwg.mxu0
    %v400 = vpack.c.bf16 %v397, %v394
    %v401 = vld [vmem:[%s5] sm:$0x1]
    %v403 = vlaneseq
    %v404 = vshrl.u32 %v403, 7
    %v405 = vsub.s32 0, %v404
    %v406 = vrot.slane %v401, %v405
    %408 = vmatprep.subr.bf16.mxu0 0
    %409 = vmatpush1.bf16.msra.mxu0 0
    %410 = vmatprep.subr.bf16.mxu0 0
    %411 = vmatpush1.bf16.msra.mxu0 0
    %412 = vmatprep.subr.bf16.mxu0 0
    %413 = vmatpush1.bf16.msra.mxu0 0
    %414 = vmatprep.subr.bf16.mxu0 0
    %415 = vmatpush1.bf16.msra.mxu0 0
    %416 = vmatprep.subr.bf16.mxu0 0
    %417 = vmatpush1.bf16.msra.mxu0 0
    %418 = vmatprep.subr.bf16.mxu0 0
    %419 = vmatpush1.bf16.msra.mxu0 0
    %420 = vmatprep.subr.bf16.mxu0 0
    %421 = vmatpush1.bf16.msra.mxu0 0
    %422 = vmatprep.subr.bf16.mxu0 0
    %423 = vmatpush1.bf16.msra.mxu0 %v400
    %424 = vmatprep.subr.bf16.mxu0 0
    %425 = vmatpush2.bf16.msra.mxu0 0
    %426 = vmatprep.subr.bf16.mxu0 0
    %427 = vmatpush2.bf16.msra.mxu0 0
    %428 = vmatprep.subr.bf16.mxu0 0
    %429 = vmatpush2.bf16.msra.mxu0 0
    %430 = vmatprep.subr.bf16.mxu0 0
    %431 = vmatpush2.bf16.msra.mxu0 0
    %432 = vmatprep.subr.bf16.mxu0 0
    %433 = vmatpush2.bf16.msra.mxu0 0
    %434 = vmatprep.subr.bf16.mxu0 0
    %435 = vmatpush2.bf16.msra.mxu0 0
    %436 = vmatprep.subr.bf16.mxu0 0
    %437 = vmatpush2.bf16.msra.mxu0 0
    %438 = vmatprep.subr.bf16.mxu0 0
    %439 = vmatpush2.bf16.msra.mxu0 0
    %440 = vmatprep.mubr.bf16.mxu0 0
    %441 = vmatmul.mubr.bf16.gmra.mxu0 %v249
    %v442 = vpop.f32.mrf.mxu0
    %v443 = vadd.f32 %v406, %v442
    %v444 = vpop.f32.mrf.mxu0
    %v445 = vpop.f32.mrf.mxu0
    %v446 = vadd.f32 %v406, %v445
    %v447 = vpop.f32.mrf.mxu0
    %448 = vdwg.mxu0
    %v449 = vmax.f32 %v443, 0.0
    %v450 = vmax.f32 %v446, 0.0
    %v451 = vpack.c.bf16 %v450, %v449
    %v452 = vld [vmem:[#allocation10] sm:$0xf]
    %v453 = vld [vmem:[#allocation10 + $0x4] sm:$0xf]
    %v454 = vld [vmem:[#allocation10 + $0x8] sm:$0xf]
    %v455 = vld [vmem:[#allocation10 + $0xc] sm:$0xf]
    %v456 = vld [vmem:[#allocation10 + $0x10] sm:$0xf]
    %v457 = vld [vmem:[#allocation10 + $0x14] sm:$0xf]
    %v458 = vld [vmem:[#allocation10 + $0x18] sm:$0xf]
    %v459 = vld [vmem:[#allocation10 + $0x1c] sm:$0xf]
    %v460 = vld [vmem:[#allocation10 + $0x20] sm:$0xf]
    %v461 = vld [vmem:[#allocation10 + $0x24] sm:$0xf]
    %v462 = vld [vmem:[#allocation10 + $0x28] sm:$0xf]
    %v463 = vld [vmem:[#allocation10 + $0x2c] sm:$0xf]
    %v464 = vld [vmem:[#allocation10 + $0x30] sm:$0xf]
    %v465 = vld [vmem:[#allocation10 + $0x34] sm:$0xf]
    %v466 = vld [vmem:[#allocation10 + $0x38] sm:$0xf]
    %v467 = vld [vmem:[#allocation10 + $0x3c] sm:$0xf]
    %v484 = vunpack.c.l.b16 %v452
    %v485 = vunpack.c.l.b16 %v453
    %v486 = vunpack.c.l.b16 %v454
    %v487 = vunpack.c.l.b16 %v455
    %v488 = vunpack.c.l.b16 %v456
    %v489 = vunpack.c.l.b16 %v457
    %v490 = vunpack.c.l.b16 %v458
    %v491 = vunpack.c.l.b16 %v459
    %v492 = vunpack.c.l.b16 %v460
    %v493 = vunpack.c.l.b16 %v461
    %v494 = vunpack.c.l.b16 %v462
    %v495 = vunpack.c.l.b16 %v463
    %v496 = vunpack.c.l.b16 %v464
    %v497 = vunpack.c.l.b16 %v465
    %v498 = vunpack.c.l.b16 %v466
    %v499 = vunpack.c.l.b16 %v467
    %v500 = vpack.c.b16 %v485, %v484
    %v501 = vpack.c.b16 %v487, %v486
    %v502 = vpack.c.b16 %v489, %v488
    %v503 = vpack.c.b16 %v491, %v490
    %v504 = vpack.c.b16 %v493, %v492
    %v505 = vpack.c.b16 %v495, %v494
    %v506 = vpack.c.b16 %v497, %v496
    %v507 = vpack.c.b16 %v499, %v498
    %516 = vmatprep.subr.bf16.mxu0 0
    %517 = vmatpush1.bf16.msra.mxu0 %v507
    %518 = vmatprep.subr.bf16.mxu0 0
    %519 = vmatpush1.bf16.msra.mxu0 %v506
    %520 = vmatprep.subr.bf16.mxu0 0
    %521 = vmatpush1.bf16.msra.mxu0 %v505
    %522 = vmatprep.subr.bf16.mxu0 0
    %523 = vmatpush1.bf16.msra.mxu0 %v504
    %524 = vmatprep.subr.bf16.mxu0 0
    %525 = vmatpush1.bf16.msra.mxu0 %v503
    %526 = vmatprep.subr.bf16.mxu0 0
    %527 = vmatpush1.bf16.msra.mxu0 %v502
    %528 = vmatprep.subr.bf16.mxu0 0
    %529 = vmatpush1.bf16.msra.mxu0 %v501
    %530 = vmatprep.subr.bf16.mxu0 0
    %531 = vmatpush1.bf16.msra.mxu0 %v500
    %532 = vmatprep.subr.bf16.mxu0 0
    %533 = vmatpush2.bf16.msra.mxu0 0
    %534 = vmatprep.subr.bf16.mxu0 0
    %535 = vmatpush2.bf16.msra.mxu0 0
    %536 = vmatprep.subr.bf16.mxu0 0
    %537 = vmatpush2.bf16.msra.mxu0 0
    %538 = vmatprep.subr.bf16.mxu0 0
    %539 = vmatpush2.bf16.msra.mxu0 0
    %540 = vmatprep.subr.bf16.mxu0 0
    %541 = vmatpush2.bf16.msra.mxu0 0
    %542 = vmatprep.subr.bf16.mxu0 0
    %543 = vmatpush2.bf16.msra.mxu0 0
    %544 = vmatprep.subr.bf16.mxu0 0
    %545 = vmatpush2.bf16.msra.mxu0 0
    %546 = vmatprep.subr.bf16.mxu0 0
    %547 = vmatpush2.bf16.msra.mxu0 0
    %548 = vmatprep.mubr.bf16.mxu0 0
    %549 = vmatmul.mubr.bf16.gmra.mxu0 %v451
    %v550 = vpop.f32.mrf.mxu0
    %v551 = vadd.f32 0.0, %v550
    %v552 = vpop.f32.mrf.mxu0
    %v553 = vpop.f32.mrf.mxu0
    %v554 = vadd.f32 0.0, %v553
    %v555 = vpop.f32.mrf.mxu0
    %556 = vdwg.mxu0
    %v557 = vpack.c.bf16 %v554, %v551
    %v558 = vld [vmem:[%s7] sm:$0x1]
    %v560 = vlaneseq
    %v561 = vshrl.u32 %v560, 7
    %v562 = vsub.s32 0, %v561
    %v563 = vrot.slane %v558, %v562
    %565 = vmatprep.subr.bf16.mxu0 0
    %566 = vmatpush1.bf16.msra.mxu0 0
    %567 = vmatprep.subr.bf16.mxu0 0
    %568 = vmatpush1.bf16.msra.mxu0 0
    %569 = vmatprep.subr.bf16.mxu0 0
    %570 = vmatpush1.bf16.msra.mxu0 0
    %571 = vmatprep.subr.bf16.mxu0 0
    %572 = vmatpush1.bf16.msra.mxu0 0
    %573 = vmatprep.subr.bf16.mxu0 0
    %574 = vmatpush1.bf16.msra.mxu0 0
    %575 = vmatprep.subr.bf16.mxu0 0
    %576 = vmatpush1.bf16.msra.mxu0 0
    %577 = vmatprep.subr.bf16.mxu0 0
    %578 = vmatpush1.bf16.msra.mxu0 0
    %579 = vmatprep.subr.bf16.mxu0 0
    %580 = vmatpush1.bf16.msra.mxu0 %v557
    %581 = vmatprep.subr.bf16.mxu0 0
    %582 = vmatpush2.bf16.msra.mxu0 0
    %583 = vmatprep.subr.bf16.mxu0 0
    %584 = vmatpush2.bf16.msra.mxu0 0
    %585 = vmatprep.subr.bf16.mxu0 0
    %586 = vmatpush2.bf16.msra.mxu0 0
    %587 = vmatprep.subr.bf16.mxu0 0
    %588 = vmatpush2.bf16.msra.mxu0 0
    %589 = vmatprep.subr.bf16.mxu0 0
    %590 = vmatpush2.bf16.msra.mxu0 0
    %591 = vmatprep.subr.bf16.mxu0 0
    %592 = vmatpush2.bf16.msra.mxu0 0
    %593 = vmatprep.subr.bf16.mxu0 0
    %594 = vmatpush2.bf16.msra.mxu0 0
    %595 = vmatprep.subr.bf16.mxu0 0
    %596 = vmatpush2.bf16.msra.mxu0 0
    %597 = vmatprep.mubr.bf16.mxu0 0
    %598 = vmatmul.mubr.bf16.gmra.mxu0 %v249
    %v599 = vpop.f32.mrf.mxu0
    %v600 = vadd.f32 %v563, %v599
    %v601 = vpop.f32.mrf.mxu0
    %v602 = vpop.f32.mrf.mxu0
    %v603 = vadd.f32 %v563, %v602
    %v604 = vpop.f32.mrf.mxu0
    %605 = vdwg.mxu0
    %v606 = vmax.f32 %v600, 0.0
    %v607 = vmax.f32 %v603, 0.0
    %v608 = vpack.c.bf16 %v607, %v606
    %v609 = vld [vmem:[#allocation11] sm:$0xf]
    %v610 = vld [vmem:[#allocation11 + $0x4] sm:$0xf]
    %v611 = vld [vmem:[#allocation11 + $0x8] sm:$0xf]
    %v612 = vld [vmem:[#allocation11 + $0xc] sm:$0xf]
    %v613 = vld [vmem:[#allocation11 + $0x10] sm:$0xf]
    %v614 = vld [vmem:[#allocation11 + $0x14] sm:$0xf]
    %v615 = vld [vmem:[#allocation11 + $0x18] sm:$0xf]
    %v616 = vld [vmem:[#allocation11 + $0x1c] sm:$0xf]
    %v617 = vld [vmem:[#allocation11 + $0x20] sm:$0xf]
    %v618 = vld [vmem:[#allocation11 + $0x24] sm:$0xf]
    %v619 = vld [vmem:[#allocation11 + $0x28] sm:$0xf]
    %v620 = vld [vmem:[#allocation11 + $0x2c] sm:$0xf]
    %v621 = vld [vmem:[#allocation11 + $0x30] sm:$0xf]
    %v622 = vld [vmem:[#allocation11 + $0x34] sm:$0xf]
    %v623 = vld [vmem:[#allocation11 + $0x38] sm:$0xf]
    %v624 = vld [vmem:[#allocation11 + $0x3c] sm:$0xf]
    %v641 = vunpack.c.l.b16 %v609
    %v642 = vunpack.c.l.b16 %v610
    %v643 = vunpack.c.l.b16 %v611
    %v644 = vunpack.c.l.b16 %v612
    %v645 = vunpack.c.l.b16 %v613
    %v646 = vunpack.c.l.b16 %v614
    %v647 = vunpack.c.l.b16 %v615
    %v648 = vunpack.c.l.b16 %v616
    %v649 = vunpack.c.l.b16 %v617
    %v650 = vunpack.c.l.b16 %v618
    %v651 = vunpack.c.l.b16 %v619
    %v652 = vunpack.c.l.b16 %v620
    %v653 = vunpack.c.l.b16 %v621
    %v654 = vunpack.c.l.b16 %v622
    %v655 = vunpack.c.l.b16 %v623
    %v656 = vunpack.c.l.b16 %v624
    %v657 = vpack.c.b16 %v642, %v641
    %v658 = vpack.c.b16 %v644, %v643
    %v659 = vpack.c.b16 %v646, %v645
    %v660 = vpack.c.b16 %v648, %v647
    %v661 = vpack.c.b16 %v650, %v649
    %v662 = vpack.c.b16 %v652, %v651
    %v663 = vpack.c.b16 %v654, %v653
    %v664 = vpack.c.b16 %v656, %v655
    %673 = vmatprep.subr.bf16.mxu0 0
    %674 = vmatpush1.bf16.msra.mxu0 %v664
    %675 = vmatprep.subr.bf16.mxu0 0
    %676 = vmatpush1.bf16.msra.mxu0 %v663
    %677 = vmatprep.subr.bf16.mxu0 0
    %678 = vmatpush1.bf16.msra.mxu0 %v662
    %679 = vmatprep.subr.bf16.mxu0 0
    %680 = vmatpush1.bf16.msra.mxu0 %v661
    %681 = vmatprep.subr.bf16.mxu0 0
    %682 = vmatpush1.bf16.msra.mxu0 %v660
    %683 = vmatprep.subr.bf16.mxu0 0
    %684 = vmatpush1.bf16.msra.mxu0 %v659
    %685 = vmatprep.subr.bf16.mxu0 0
    %686 = vmatpush1.bf16.msra.mxu0 %v658
    %687 = vmatprep.subr.bf16.mxu0 0
    %688 = vmatpush1.bf16.msra.mxu0 %v657
    %689 = vmatprep.subr.bf16.mxu0 0
    %690 = vmatpush2.bf16.msra.mxu0 0
    %691 = vmatprep.subr.bf16.mxu0 0
    %692 = vmatpush2.bf16.msra.mxu0 0
    %693 = vmatprep.subr.bf16.mxu0 0
    %694 = vmatpush2.bf16.msra.mxu0 0
    %695 = vmatprep.subr.bf16.mxu0 0
    %696 = vmatpush2.bf16.msra.mxu0 0
    %697 = vmatprep.subr.bf16.mxu0 0
    %698 = vmatpush2.bf16.msra.mxu0 0
    %699 = vmatprep.subr.bf16.mxu0 0
    %700 = vmatpush2.bf16.msra.mxu0 0
    %701 = vmatprep.subr.bf16.mxu0 0
    %702 = vmatpush2.bf16.msra.mxu0 0
    %703 = vmatprep.subr.bf16.mxu0 0
    %704 = vmatpush2.bf16.msra.mxu0 0
    %705 = vmatprep.mubr.bf16.mxu0 0
    %706 = vmatmul.mubr.bf16.gmra.mxu0 %v608
    %v707 = vpop.f32.mrf.mxu0
    %v708 = vadd.f32 0.0, %v707
    %v709 = vpop.f32.mrf.mxu0
    %v710 = vpop.f32.mrf.mxu0
    %v711 = vadd.f32 0.0, %v710
    %v712 = vpop.f32.mrf.mxu0
    %713 = vdwg.mxu0
    %v714 = vpack.c.bf16 %v711, %v708
    %v715 = vld [vmem:[%s9] sm:$0x1]
    %v717 = vlaneseq
    %v718 = vshrl.u32 %v717, 7
    %v719 = vsub.s32 0, %v718
    %v720 = vrot.slane %v715, %v719
    %722 = vmatprep.subr.bf16.mxu0 0
    %723 = vmatpush1.bf16.msra.mxu0 0
    %724 = vmatprep.subr.bf16.mxu0 0
    %725 = vmatpush1.bf16.msra.mxu0 0
    %726 = vmatprep.subr.bf16.mxu0 0
    %727 = vmatpush1.bf16.msra.mxu0 0
    %728 = vmatprep.subr.bf16.mxu0 0
    %729 = vmatpush1.bf16.msra.mxu0 0
    %730 = vmatprep.subr.bf16.mxu0 0
    %731 = vmatpush1.bf16.msra.mxu0 0
    %732 = vmatprep.subr.bf16.mxu0 0
    %733 = vmatpush1.bf16.msra.mxu0 0
    %734 = vmatprep.subr.bf16.mxu0 0
    %735 = vmatpush1.bf16.msra.mxu0 0
    %736 = vmatprep.subr.bf16.mxu0 0
    %737 = vmatpush1.bf16.msra.mxu0 %v714
    %738 = vmatprep.subr.bf16.mxu0 0
    %739 = vmatpush2.bf16.msra.mxu0 0
    %740 = vmatprep.subr.bf16.mxu0 0
    %741 = vmatpush2.bf16.msra.mxu0 0
    %742 = vmatprep.subr.bf16.mxu0 0
    %743 = vmatpush2.bf16.msra.mxu0 0
    %744 = vmatprep.subr.bf16.mxu0 0
    %745 = vmatpush2.bf16.msra.mxu0 0
    %746 = vmatprep.subr.bf16.mxu0 0
    %747 = vmatpush2.bf16.msra.mxu0 0
    %748 = vmatprep.subr.bf16.mxu0 0
    %749 = vmatpush2.bf16.msra.mxu0 0
    %750 = vmatprep.subr.bf16.mxu0 0
    %751 = vmatpush2.bf16.msra.mxu0 0
    %752 = vmatprep.subr.bf16.mxu0 0
    %753 = vmatpush2.bf16.msra.mxu0 0
    %754 = vmatprep.mubr.bf16.mxu0 0
    %755 = vmatmul.mubr.bf16.gmra.mxu0 %v249
    %v756 = vpop.f32.mrf.mxu0
    %v757 = vadd.f32 %v720, %v756
    %v758 = vpop.f32.mrf.mxu0
    %v759 = vpop.f32.mrf.mxu0
    %v760 = vadd.f32 %v720, %v759
    %v761 = vpop.f32.mrf.mxu0
    %762 = vdwg.mxu0
    %763 = vst [vmem:[#allocation13] sm:$0xff] %v757
    %764 = vst [vmem:[#allocation13 + $0x8] sm:$0xff] %v760
    // Predicated region
    $region66: #{tpu_custom_call.1} parent=1 // pred_check
      _
    $region67: #{tpu_custom_call.1} parent=1 // pred_check_branch
      %766 = sbr.rel (0) target = $region69
    $region68: #{tpu_custom_call.1} parent=1 // pred_region
      %s768 = ssub.s32 256, 256
      %769 = vsyncadd [#allocation4], %s768
      %s770 = sshll.u32 [#allocation13], 4
      %s771 = int_to_ptr.vmem [resolvable:$true] %s770
      %776 = dma.vmem_to_hbm [thread:$0]  %s771, 256, %s10, [#allocation4], 128, 128, 8
    $region69: #{tpu_custom_call.1} parent=1 // pred_fallthru
      _
    // Predicated region
    $region70: #{tpu_custom_call.1} parent=1 // pred_check
      _
    $region71: #{tpu_custom_call.1} parent=1 // pred_check_branch
      %778 = sbr.rel (0) target = $region73
    $region72: #{tpu_custom_call.1} parent=1 // pred_region
      %779 = dma.done [#allocation4], 256
    $region73: #{tpu_custom_call.1} parent=1 // pred_fallthru
      _
    %780 = vsyncpa [#allocation3], 1
    %781 = vsyncpa [#allocation6], 1
    %782 = vsyncpa [#allocation9], 1
    %783 = vsyncpa [#allocation12], 1
    %784 = vsyncpa [#allocation4], 1

</llo_original>
